<compile_context>
chip_gen: v7x
topology: tpu7x:2x2x1
jax: 0.10.0
libtpu: 0.0.40
codegen_flags: <defaults>
</compile_context>

<pallas_src>
import functools

import jax
import jax.numpy as jnp
from jax.experimental import pallas as pl
from jax.experimental.pallas import tpu as pltpu


# ---------------------------------------------------------------------------
# select_indices (glue, plain JAX — pure indexing / concatenation).
# Order matches the PyTorch reference cat order:
#   [left_arm, right_arm, left_hand, right_hand, face]
# ---------------------------------------------------------------------------
def select_indices(x):
    left_arm = x[:, :, 3:5, :]
    right_arm = x[:, :, 6:8, :]
    face = x[:, :, 25:95, :]
    left_hand = x[:, :, 95:116, :]
    right_hand = x[:, :, 116:137, :]
    return jnp.concatenate(
        [left_arm, right_arm, left_hand, right_hand, face], axis=2
    )


# ---------------------------------------------------------------------------
# Fused (both-direction) input projection, tiled over M.
# ---------------------------------------------------------------------------
def _linear_kernel(x_ref, w_ref, b_ref, o_ref):
    o_ref[...] = (
        jnp.dot(x_ref[...], w_ref[...], preferred_element_type=jnp.float32)
        + b_ref[...]
    ).astype(o_ref.dtype)


def linear(x, w_t, b, *, tile_m=512):
    """y = x @ w_t + b.  x: (M, K), w_t: (K, N), b: (N,)."""
    M, K = x.shape
    N = w_t.shape[1]
    tm = min(tile_m, M)
    if tm != M and tm % 8 != 0:   # (8,128) block rule: divisible by 8 or full
        tm = M
    grid_m = pl.cdiv(M, tm)
    return pl.pallas_call(
        _linear_kernel,
        out_shape=jax.ShapeDtypeStruct((M, N), jnp.float32),
        grid=(grid_m,),
        in_specs=[
            pl.BlockSpec((tm, K), lambda i: (i, 0)),
            pl.BlockSpec((K, N), lambda i: (0, 0)),
            pl.BlockSpec((1, N), lambda i: (0, 0)),
        ],
        out_specs=pl.BlockSpec((tm, N), lambda i: (i, 0)),
        compiler_params=pltpu.CompilerParams(
            dimension_semantics=("parallel",)),
    )(x, w_t, b.reshape(1, N))


# ---------------------------------------------------------------------------
# Fused bidirectional GRU recurrence: entire time loop inside one kernel call.
#   gx     : (T, B, 6H)  -- cols [0:3H]=fwd proj, [3H:6H]=bwd proj (non-reversed)
#   w_hh_t : (H, 6H)     -- [W_hh_fwd^T | W_hh_bwd^T]
#   b_hh   : (6H,)       -- [b_hh_fwd  | b_hh_bwd ]
#   out    : (T, B, 2H)  -- cols [0:H]=fwd output, [H:2H]=bwd output
# ---------------------------------------------------------------------------
def _bigru_kernel(gx_ref, whh_ref, bhh_ref, out_ref, *, seq_len, batch, hidden):
    T, B, H = seq_len, batch, hidden
    w = whh_ref[...]                                       # (H, 6H)
    b = jnp.broadcast_to(bhh_ref[...], (2 * B, 6 * H))     # hoisted broadcast

    def gates(gx, gh, h):
        # PyTorch gate order [r, z, n]; n = tanh(gx_n + r * (W_hn h + b_hn))
        r = jax.nn.sigmoid(gx[:, 0:H] + gh[:, 0:H])
        z = jax.nn.sigmoid(gx[:, H:2 * H] + gh[:, H:2 * H])
        n = jnp.tanh(gx[:, 2 * H:3 * H] + r * gh[:, 2 * H:3 * H])
        return (1.0 - z) * n + z * h

    def step(t, h_both):            # h_both (2B, H): rows [0:B]=fwd, [B:2B]=bwd
        rt = T - 1 - t
        # single stacked MXU op per step: (2B, H) @ (H, 6H)
        gh = jnp.dot(h_both, w, preferred_element_type=jnp.float32) + b
        h_f_new = gates(gx_ref[t, :, 0:3 * H], gh[:B, 0:3 * H], h_both[:B])
        h_b_new = gates(gx_ref[rt, :, 3 * H:6 * H], gh[B:, 3 * H:6 * H],
                        h_both[B:])
        out_ref[t, :, 0:H] = h_f_new.astype(out_ref.dtype)
        out_ref[rt, :, H:2 * H] = h_b_new.astype(out_ref.dtype)
        return jnp.concatenate([h_f_new, h_b_new], axis=0)

    h0 = jnp.zeros((2 * B, H), jnp.float32)
    jax.lax.fori_loop(0, T, step, h0, unroll=(T <= 16))


def bigru(gx, w_hh_t, b_hh, hidden):
    """gx: (T, B, 6H) fused input projections.  Returns (T, B, 2H)."""
    T, B, H6 = gx.shape
    H = hidden
    kernel = functools.partial(
        _bigru_kernel, seq_len=T, batch=B, hidden=H)
    return pl.pallas_call(
        kernel,
        out_shape=jax.ShapeDtypeStruct((T, B, 2 * H), jnp.float32),
        grid=(1,),
        in_specs=[
            pl.BlockSpec((T, B, H6), lambda i: (0, 0, 0)),
            pl.BlockSpec((H, H6), lambda i: (0, 0)),
            pl.BlockSpec((1, H6), lambda i: (0, 0)),
        ],
        out_specs=pl.BlockSpec((T, B, 2 * H), lambda i: (0, 0, 0)),
        compiler_params=pltpu.CompilerParams(
            dimension_semantics=("arbitrary",)),
    )(gx, w_hh_t, b_hh.reshape(1, H6))


# ---------------------------------------------------------------------------
# Head: mean over time + fc1 + (dropout identity, eval) + fc2
# ---------------------------------------------------------------------------
def _head_kernel(x_ref, w1_ref, b1_ref, w2_ref, b2_ref, o_ref):
    xm = jnp.mean(x_ref[...].astype(jnp.float32), axis=0)            # (B, 2H)
    h = jnp.dot(xm, w1_ref[...], preferred_element_type=jnp.float32) + b1_ref[...]
    # dropout(p=0.1) is identity in eval mode
    o_ref[...] = (
        jnp.dot(h, w2_ref[...], preferred_element_type=jnp.float32)
        + b2_ref[...]
    ).astype(o_ref.dtype)


def head(x_seq, w1_t, b1, w2_t, b2):
    T, B, F = x_seq.shape
    Dh = w1_t.shape[1]
    Nc = w2_t.shape[1]
    return pl.pallas_call(
        _head_kernel,
        out_shape=jax.ShapeDtypeStruct((B, Nc), jnp.float32),
        grid=(1,),
        in_specs=[
            pl.BlockSpec((T, B, F), lambda i: (0, 0, 0)),
            pl.BlockSpec((F, Dh), lambda i: (0, 0)),
            pl.BlockSpec((1, Dh), lambda i: (0, 0)),
            pl.BlockSpec((Dh, Nc), lambda i: (0, 0)),
            pl.BlockSpec((1, Nc), lambda i: (0, 0)),
        ],
        out_specs=pl.BlockSpec((B, Nc), lambda i: (0, 0)),
    )(x_seq, w1_t, b1.reshape(1, Dh), w2_t, b2.reshape(1, Nc))


# ---------------------------------------------------------------------------
# Parameter init (deterministic, PyTorch-style uniform ranges).
# Per-layer weights are stored pre-fused across directions:
#   w_ih_t: (in, 6H) = [W_ih_fwd^T | W_ih_bwd^T],  b_ih: (6H,)
#   w_hh_t: (H, 6H)  = [W_hh_fwd^T | W_hh_bwd^T],  b_hh: (6H,)
# ---------------------------------------------------------------------------
def init_params(key, input_size, hidden_size, hidden_dim, num_layers,
                num_classes):
    params = {"hidden_size": hidden_size, "gru_layers": []}
    kg = 1.0 / (hidden_size ** 0.5)
    n_gru_keys = num_layers * 2 * 4
    keys = jax.random.split(key, n_gru_keys + 4)
    idx = 0
    for layer_idx in range(num_layers):
        in_sz = input_size if layer_idx == 0 else 2 * hidden_size
        w_ih_p, w_hh_p, b_ih_p, b_hh_p = [], [], [], []
        for _direction in ("fwd", "bwd"):
            w_ih = jax.random.uniform(keys[idx], (3 * hidden_size, in_sz),
                                      minval=-kg, maxval=kg); idx += 1
            w_hh = jax.random.uniform(keys[idx], (3 * hidden_size, hidden_size),
                                      minval=-kg, maxval=kg); idx += 1
            b_ih = jax.random.uniform(keys[idx], (3 * hidden_size,),
                                      minval=-kg, maxval=kg); idx += 1
            b_hh = jax.random.uniform(keys[idx], (3 * hidden_size,),
                                      minval=-kg, maxval=kg); idx += 1
            w_ih_p.append(w_ih.T)
            w_hh_p.append(w_hh.T)
            b_ih_p.append(b_ih)
            b_hh_p.append(b_hh)
        params["gru_layers"].append({
            "w_ih_t": jnp.concatenate(w_ih_p, axis=1).astype(jnp.float32),
            "w_hh_t": jnp.concatenate(w_hh_p, axis=1).astype(jnp.float32),
            "b_ih": jnp.concatenate(b_ih_p).astype(jnp.float32),
            "b_hh": jnp.concatenate(b_hh_p).astype(jnp.float32),
        })

    feat = 2 * hidden_size  # bidirectional
    k1 = 1.0 / (feat ** 0.5)
    k2 = 1.0 / (hidden_dim ** 0.5)
    params["fc1_w_t"] = jax.random.uniform(
        keys[idx], (hidden_dim, feat), minval=-k1, maxval=k1).T.astype(jnp.float32); idx += 1
    params["fc1_b"] = jax.random.uniform(
        keys[idx], (hidden_dim,), minval=-k1, maxval=k1).astype(jnp.float32); idx += 1
    params["fc2_w_t"] = jax.random.uniform(
        keys[idx], (num_classes, hidden_dim), minval=-k2, maxval=k2).T.astype(jnp.float32); idx += 1
    params["fc2_b"] = jax.random.uniform(
        keys[idx], (num_classes,), minval=-k2, maxval=k2).astype(jnp.float32); idx += 1
    return params


# ---------------------------------------------------------------------------
# Forward pass (mirrors gru.forward)
# ---------------------------------------------------------------------------
def gru_model_forward(x, params):
    B, T, J, C = x.shape
    x = select_indices(x)                        # (B, T, 116, C)
    x = x.reshape(B, T, -1)                      # (B, T, D)  flatten(start_dim=2)
    seq = jnp.transpose(x, (1, 0, 2)).astype(jnp.float32)   # (T, B, D)

    H = params["hidden_size"]
    layer_in = seq
    for layer in params["gru_layers"]:
        Tt, Bb, Din = layer_in.shape
        # fused both-direction input projection (time-pointwise, no reversal)
        gx = linear(layer_in.reshape(Tt * Bb, Din), layer["w_ih_t"],
                    layer["b_ih"])
        gx = gx.reshape(Tt, Bb, 6 * H)
        # fused bidirectional recurrence (single pallas_call per layer)
        layer_in = bigru(gx, layer["w_hh_t"], layer["b_hh"], hidden=H)

    # mean over seq dim + fc1 + dropout(identity, eval) + fc2
    return head(layer_in, params["fc1_w_t"], params["fc1_b"],
                params["fc2_w_t"], params["fc2_b"])


# ---------------------------------------------------------------------------
# main
# ---------------------------------------------------------------------------
if __name__ == "__main__":
    # Small but structure-consistent shapes: 137 joints (needed by
    # select_indices), 3 coords per joint -> input_size = 116 * 3 = 348.
    B, T, J, C = 2, 8, 137, 3
    hidden_size = 128
    hidden_dim = 128
    num_layers = 3
    num_classes = 32
    input_size = 116 * C

    key = jax.random.PRNGKey(0)
    k_x, k_p = jax.random.split(key)
    x = jax.random.normal(k_x, (B, T, J, C), dtype=jnp.float32)
    params = init_params(k_p, input_size, hidden_size, hidden_dim,
                         num_layers, num_classes)

    out = gru_model_forward(x, params)
    out = jax.block_until_ready(out)
    assert out.shape == (B, num_classes), out.shape
    print("KERNEL_OK")
</pallas_src>

<mosaic_0001>
module attributes {stable_mosaic.version = 11 : i64} {
  func.func @_linear_kernel(%arg0: i32, %arg1: memref<16x348xf32, #tpu.memory_space<vmem>>, %arg2: memref<348x768xf32, #tpu.memory_space<vmem>>, %arg3: memref<1x768xf32, #tpu.memory_space<vmem>>, %arg4: memref<16x768xf32, #tpu.memory_space<vmem>>) attributes {dimension_semantics = [#tpu.dimension_semantics<parallel>], iteration_bounds = array<i64: 1>, scalar_prefetch = 0 : i64, scratch_operands = 0 : i64, tpu.core_type = #tpu.core_type<tc>, window_params = [{transform_indices = @transform_0, window_bounds = array<i64: 16, 348>}, {pipeline_mode = #tpu.pipeline_mode<synchronous>, transform_indices = @transform_1, window_bounds = array<i64: 348, 768>}, {pipeline_mode = #tpu.pipeline_mode<synchronous>, transform_indices = @transform_2, window_bounds = array<i64: 1, 768>}, {transform_indices = @transform_3, window_bounds = array<i64: 16, 768>}]} {
    %c0 = arith.constant 0 : index
    %c0_0 = arith.constant 0 : index
    %0 = vector.load %arg1[%c0, %c0_0] : memref<16x348xf32, #tpu.memory_space<vmem>>, vector<16x348xf32>
    %c0_1 = arith.constant 0 : index
    %c0_2 = arith.constant 0 : index
    %1 = vector.load %arg2[%c0_1, %c0_2] : memref<348x768xf32, #tpu.memory_space<vmem>>, vector<348x768xf32>
    %cst = arith.constant dense<0.000000e+00> : vector<16x768xf32>
    %2 = tpu.matmul %0, %1, %cst {dimension_numbers = #tpu.dot_dimension_numbers<[1], [0], [0], [1], [0, 0, 1, 1], [], []>} : vector<16x348xf32>, vector<348x768xf32>, vector<16x768xf32> -> vector<16x768xf32>
    %c0_3 = arith.constant 0 : index
    %c0_4 = arith.constant 0 : index
    %3 = vector.load %arg3[%c0_3, %c0_4] : memref<1x768xf32, #tpu.memory_space<vmem>>, vector<1x768xf32>
    %4 = vector.broadcast %3 : vector<1x768xf32> to vector<16x768xf32>
    %5 = arith.addf %2, %4 : vector<16x768xf32>
    %c0_5 = arith.constant 0 : index
    %c0_6 = arith.constant 0 : index
    %6 = vector.load %arg4[%c0_5, %c0_6] : memref<16x768xf32, #tpu.memory_space<vmem>>, vector<16x768xf32>
    tpu.vector_store %arg4[%c0_5, %c0_6], %5 {strides = array<i32>} : memref<16x768xf32, #tpu.memory_space<vmem>>, vector<16x768xf32>,
    return
  }
  func.func @transform_0(%arg0: i32) -> (i32, i32) {
    %c0_i32 = arith.constant 0 : i32
    %c0_i32_0 = arith.constant 0 : i32
    return %arg0, %c0_i32 : i32, i32
  }
  func.func @transform_1(%arg0: i32) -> (i32, i32) {
    %c0_i32 = arith.constant 0 : i32
    %c0_i32_0 = arith.constant 0 : i32
    %c0_i32_1 = arith.constant 0 : i32
    return %c0_i32, %c0_i32_0 : i32, i32
  }
  func.func @transform_2(%arg0: i32) -> (i32, i32) {
    %c0_i32 = arith.constant 0 : i32
    %c0_i32_0 = arith.constant 0 : i32
    %c0_i32_1 = arith.constant 0 : i32
    return %c0_i32, %c0_i32_0 : i32, i32
  }
  func.func @transform_3(%arg0: i32) -> (i32, i32) {
    %c0_i32 = arith.constant 0 : i32
    %c0_i32_0 = arith.constant 0 : i32
    return %arg0, %c0_i32 : i32, i32
  }
}

</mosaic_0001>

<llo_original>
// kernel: tpu_custom_call.1
$region0: #{tpu_custom_call.1}
  #allocation0 [shape = 'u32[]', space=smem, size = 0x4, offset = 0x4, fixed_abs, tag = 'smem constant byte address 0x4 - core index']
  #allocation1 [shape = 'u32[144,128]{1,0:T(1,128)}', space=vmem, size = 0x12000, scoped, tag = 'internal scratch']
  %s0 = inlined_call_operand.hbm [shape: f32[16,348], index: 0, kind: input, shape index: {}]
  %s1 = inlined_call_operand.hbm [shape: f32[348,768], index: 1, kind: input, shape index: {}]
  %s2 = inlined_call_operand.hbm [shape: f32[1,768], index: 2, kind: input, shape index: {}]
  %s3 = inlined_call_operand.hbm [shape: f32[16,768], index: 3, kind: output, shape index: {}]
  %s4 = sld [smem:[#allocation0]]
  $region34: #{tpu_custom_call.1} parent=0
    _
  %s6 = ssub.s32 1, %s4
  %s7 = scalar_select 0, %s6, %s4
  $region1: #{tpu_custom_call.1} parent=0
    #allocation2 [shape = 'u8[24576]{0}', space=vmem, size = 0x6000, scoped, tag = 'input window, operand 0, single buffered']
    #allocation3 [shape = 's32[1]{0}', space=sflag, size = 0x4, scoped, tag = 'scoped memory for tpu_custom_call.1']
    #allocation4 [shape = 's32[1]{0}', space=sflag, size = 0x4, scoped, tag = 'scoped memory for tpu_custom_call.1']
    #allocation5 [shape = 'u8[1081344]{0}', space=vmem, size = 0x108000, scoped, tag = 'input window, operand 1, single buffered']
    #allocation6 [shape = 's32[1]{0}', space=sflag, size = 0x4, scoped, tag = 'scoped memory for tpu_custom_call.1']
    #allocation7 [shape = 'u8[3072]{0}', space=vmem, size = 0xc00, scoped, tag = 'input window, operand 2, single buffered']
    #allocation8 [shape = 'u8[49152]{0}', space=vmem, size = 0xc000, scoped, tag = 'output window, operand 0, single buffered']
    %8 = vsyncpa [#allocation3], 0
    %9 = vsyncpa [#allocation6], 0
    %10 = vsyncpa [#allocation4], 0
    // Predicated region
    $region2: #{tpu_custom_call.1} parent=1 // pred_check
      _
    $region3: #{tpu_custom_call.1} parent=1 // pred_check_branch
      %12 = sbr.rel (0) target = $region5
    $region4: #{tpu_custom_call.1} parent=1 // pred_region
      %s14 = ssub.s32 768, 768
      %15 = vsyncadd [#allocation3], %s14
      %s16 = sshll.u32 [#allocation2], 4
      %s17 = int_to_ptr.vmem [resolvable:$true] %s16
      %22 = dma.hbm_to_vmem [thread:$0]  %s0, 768, %s17, [#allocation3], 384, 384, 24
    $region5: #{tpu_custom_call.1} parent=1 // pred_fallthru
      _
    // Predicated region
    $region6: #{tpu_custom_call.1} parent=1 // pred_check
      _
    $region7: #{tpu_custom_call.1} parent=1 // pred_check_branch
      %24 = sbr.rel (0) target = $region9
    $region8: #{tpu_custom_call.1} parent=1 // pred_region
      %s26 = ssub.s32 33792, 33792
      %27 = vsyncadd [#allocation6], %s26
      %s28 = sshll.u32 [#allocation5], 4
      %s29 = int_to_ptr.vmem [resolvable:$true] %s28
      %34 = dma.hbm_to_vmem [thread:$0]  %s1, 33792, %s29, [#allocation6], 768, 768, 48
    $region9: #{tpu_custom_call.1} parent=1 // pred_fallthru
      _
    // Predicated region
    $region10: #{tpu_custom_call.1} parent=1 // pred_check
      _
    $region11: #{tpu_custom_call.1} parent=1 // pred_check_branch
      %36 = sbr.rel (0) target = $region13
    $region12: #{tpu_custom_call.1} parent=1 // pred_region
      %s38 = ssub.s32 96, 96
      %39 = vsyncadd [#allocation6], %s38
      %s41 = sshll.u32 [#allocation7], 4
      %s42 = int_to_ptr.vmem [resolvable:$true] %s41
      %44 = dma.hbm_to_vmem [thread:$0]  %s2, 96, %s42, [#allocation6]
    $region13: #{tpu_custom_call.1} parent=1 // pred_fallthru
      _
    // Predicated region
    $region14: #{tpu_custom_call.1} parent=1 // pred_check
      _
    $region15: #{tpu_custom_call.1} parent=1 // pred_check_branch
      %46 = sbr.rel (0) target = $region17
    $region16: #{tpu_custom_call.1} parent=1 // pred_region
      %47 = dma.done [#allocation3], 768
    $region17: #{tpu_custom_call.1} parent=1 // pred_fallthru
      _
    // Predicated region
    $region18: #{tpu_custom_call.1} parent=1 // pred_check
      _
    $region19: #{tpu_custom_call.1} parent=1 // pred_check_branch
      %49 = sbr.rel (0) target = $region21
    $region20: #{tpu_custom_call.1} parent=1 // pred_region
      %50 = dma.done [#allocation6], 33792
    $region21: #{tpu_custom_call.1} parent=1 // pred_fallthru
      _
    // Predicated region
    $region22: #{tpu_custom_call.1} parent=1 // pred_check
      _
    $region23: #{tpu_custom_call.1} parent=1 // pred_check_branch
      %52 = sbr.rel (0) target = $region25
    $region24: #{tpu_custom_call.1} parent=1 // pred_region
      %53 = dma.done [#allocation6], 96
    $region25: #{tpu_custom_call.1} parent=1 // pred_fallthru
      _
    %v54 = vld [vmem:[#allocation2] sm:$0xff]
    %v55 = vld [vmem:[#allocation2 + $0x8] sm:$0xff]
    %v56 = vld [vmem:[#allocation2 + $0x10] sm:$0xff]
    %v57 = vld [vmem:[#allocation2 + $0x18] sm:$0xff]
    %v58 = vld [vmem:[#allocation2 + $0x20] sm:$0xff]
    %v59 = vld [vmem:[#allocation2 + $0x28] sm:$0xff]
    %v60 = vld [vmem:[#allocation5] sm:$0xff]
    %v61 = vld [vmem:[#allocation5 + $0x8] sm:$0xff]
    %v62 = vld [vmem:[#allocation5 + $0x10] sm:$0xff]
    %v63 = vld [vmem:[#allocation5 + $0x18] sm:$0xff]
    %v64 = vld [vmem:[#allocation5 + $0x20] sm:$0xff]
    %v65 = vld [vmem:[#allocation5 + $0x28] sm:$0xff]
    %v66 = vld [vmem:[#allocation5 + $0x30] sm:$0xff]
    %v67 = vld [vmem:[#allocation5 + $0x38] sm:$0xff]
    %v68 = vld [vmem:[#allocation5 + $0x40] sm:$0xff]
    %v69 = vld [vmem:[#allocation5 + $0x48] sm:$0xff]
    %v70 = vld [vmem:[#allocation5 + $0x50] sm:$0xff]
    %v71 = vld [vmem:[#allocation5 + $0x58] sm:$0xff]
    %v72 = vld [vmem:[#allocation5 + $0x60] sm:$0xff]
    %v73 = vld [vmem:[#allocation5 + $0x68] sm:$0xff]
    %v74 = vld [vmem:[#allocation5 + $0x70] sm:$0xff]
    %v75 = vld [vmem:[#allocation5 + $0x78] sm:$0xff]
    %v76 = vld [vmem:[#allocation5 + $0x80] sm:$0xff]
    %v77 = vld [vmem:[#allocation5 + $0x88] sm:$0xff]
    %v78 = vld [vmem:[#allocation5 + $0x90] sm:$0xff]
    %v79 = vld [vmem:[#allocation5 + $0x98] sm:$0xff]
    %v80 = vld [vmem:[#allocation5 + $0xa0] sm:$0xff]
    %v81 = vld [vmem:[#allocation5 + $0xa8] sm:$0xff]
    %v82 = vld [vmem:[#allocation5 + $0xb0] sm:$0xff]
    %v83 = vld [vmem:[#allocation5 + $0xb8] sm:$0xff]
    %v84 = vld [vmem:[#allocation5 + $0xc0] sm:$0xff]
    %v85 = vld [vmem:[#allocation5 + $0xc8] sm:$0xff]
    %v86 = vld [vmem:[#allocation5 + $0xd0] sm:$0xff]
    %v87 = vld [vmem:[#allocation5 + $0xd8] sm:$0xff]
    %v88 = vld [vmem:[#allocation5 + $0xe0] sm:$0xff]
    %v89 = vld [vmem:[#allocation5 + $0xe8] sm:$0xff]
    %v90 = vld [vmem:[#allocation5 + $0xf0] sm:$0xff]
    %v91 = vld [vmem:[#allocation5 + $0xf8] sm:$0xff]
    %v92 = vld [vmem:[#allocation5 + $0x100] sm:$0xff]
    %v93 = vld [vmem:[#allocation5 + $0x108] sm:$0xff]
    %v94 = vld [vmem:[#allocation5 + $0x110] sm:$0xff]
    %v95 = vld [vmem:[#allocation5 + $0x118] sm:$0xff]
    %v96 = vld [vmem:[#allocation5 + $0x120] sm:$0xff]
    %v97 = vld [vmem:[#allocation5 + $0x128] sm:$0xff]
    %v98 = vld [vmem:[#allocation5 + $0x130] sm:$0xff]
    %v99 = vld [vmem:[#allocation5 + $0x138] sm:$0xff]
    %v100 = vld [vmem:[#allocation5 + $0x140] sm:$0xff]
    %v101 = vld [vmem:[#allocation5 + $0x148] sm:$0xff]
    %v102 = vld [vmem:[#allocation5 + $0x150] sm:$0xff]
    %v103 = vld [vmem:[#allocation5 + $0x158] sm:$0xff]
    %v104 = vld [vmem:[#allocation5 + $0x160] sm:$0xff]
    %v105 = vld [vmem:[#allocation5 + $0x168] sm:$0xff]
    %v106 = vld [vmem:[#allocation5 + $0x170] sm:$0xff]
    %v107 = vld [vmem:[#allocation5 + $0x178] sm:$0xff]
    %v108 = vld [vmem:[#allocation5 + $0x180] sm:$0xff]
    %v109 = vld [vmem:[#allocation5 + $0x188] sm:$0xff]
    %v110 = vld [vmem:[#allocation5 + $0x190] sm:$0xff]
    %v111 = vld [vmem:[#allocation5 + $0x198] sm:$0xff]
    %v112 = vld [vmem:[#allocation5 + $0x1a0] sm:$0xff]
    %v113 = vld [vmem:[#allocation5 + $0x1a8] sm:$0xff]
    %v114 = vld [vmem:[#allocation5 + $0x1b0] sm:$0xff]
    %v115 = vld [vmem:[#allocation5 + $0x1b8] sm:$0xff]
    %v116 = vld [vmem:[#allocation5 + $0x1c0] sm:$0xff]
    %v117 = vld [vmem:[#allocation5 + $0x1c8] sm:$0xff]
    %v118 = vld [vmem:[#allocation5 + $0x1d0] sm:$0xff]
    %v119 = vld [vmem:[#allocation5 + $0x1d8] sm:$0xff]
    %v120 = vld [vmem:[#allocation5 + $0x1e0] sm:$0xff]
    %v121 = vld [vmem:[#allocation5 + $0x1e8] sm:$0xff]
    %v122 = vld [vmem:[#allocation5 + $0x1f0] sm:$0xff]
    %v123 = vld [vmem:[#allocation5 + $0x1f8] sm:$0xff]
    %v124 = vld [vmem:[#allocation5 + $0x200] sm:$0xff]
    %v125 = vld [vmem:[#allocation5 + $0x208] sm:$0xff]
    %v126 = vld [vmem:[#allocation5 + $0x210] sm:$0xff]
    %v127 = vld [vmem:[#allocation5 + $0x218] sm:$0xff]
    %v128 = vld [vmem:[#allocation5 + $0x220] sm:$0xff]
    %v129 = vld [vmem:[#allocation5 + $0x228] sm:$0xff]
    %v130 = vld [vmem:[#allocation5 + $0x230] sm:$0xff]
    %v131 = vld [vmem:[#allocation5 + $0x238] sm:$0xff]
    %v132 = vld [vmem:[#allocation5 + $0x240] sm:$0xff]
    %v133 = vld [vmem:[#allocation5 + $0x248] sm:$0xff]
    %v134 = vld [vmem:[#allocation5 + $0x250] sm:$0xff]
    %v135 = vld [vmem:[#allocation5 + $0x258] sm:$0xff]
    %v136 = vld [vmem:[#allocation5 + $0x260] sm:$0xff]
    %v137 = vld [vmem:[#allocation5 + $0x268] sm:$0xff]
    %v138 = vld [vmem:[#allocation5 + $0x270] sm:$0xff]
    %v139 = vld [vmem:[#allocation5 + $0x278] sm:$0xff]
    %v140 = vld [vmem:[#allocation5 + $0x280] sm:$0xff]
    %v141 = vld [vmem:[#allocation5 + $0x288] sm:$0xff]
    %v142 = vld [vmem:[#allocation5 + $0x290] sm:$0xff]
    %v143 = vld [vmem:[#allocation5 + $0x298] sm:$0xff]
    %v144 = vld [vmem:[#allocation5 + $0x2a0] sm:$0xff]
    %v145 = vld [vmem:[#allocation5 + $0x2a8] sm:$0xff]
    %v146 = vld [vmem:[#allocation5 + $0x2b0] sm:$0xff]
    %v147 = vld [vmem:[#allocation5 + $0x2b8] sm:$0xff]
    %v148 = vld [vmem:[#allocation5 + $0x2c0] sm:$0xff]
    %v149 = vld [vmem:[#allocation5 + $0x2c8] sm:$0xff]
    %v150 = vld [vmem:[#allocation5 + $0x2d0] sm:$0xff]
    %v151 = vld [vmem:[#allocation5 + $0x2d8] sm:$0xff]
    %v152 = vld [vmem:[#allocation5 + $0x2e0] sm:$0xff]
    %v153 = vld [vmem:[#allocation5 + $0x2e8] sm:$0xff]
    %v154 = vld [vmem:[#allocation5 + $0x2f0] sm:$0xff]
    %v155 = vld [vmem:[#allocation5 + $0x2f8] sm:$0xff]
    %v156 = vld [vmem:[#allocation5 + $0x300] sm:$0xff]
    %v157 = vld [vmem:[#allocation5 + $0x308] sm:$0xff]
    %v158 = vld [vmem:[#allocation5 + $0x310] sm:$0xff]
    %v159 = vld [vmem:[#allocation5 + $0x318] sm:$0xff]
    %v160 = vld [vmem:[#allocation5 + $0x320] sm:$0xff]
    %v161 = vld [vmem:[#allocation5 + $0x328] sm:$0xff]
    %v162 = vld [vmem:[#allocation5 + $0x330] sm:$0xff]
    %v163 = vld [vmem:[#allocation5 + $0x338] sm:$0xff]
    %v164 = vld [vmem:[#allocation5 + $0x340] sm:$0xff]
    %v165 = vld [vmem:[#allocation5 + $0x348] sm:$0xff]
    %v166 = vld [vmem:[#allocation5 + $0x350] sm:$0xff]
    %v167 = vld [vmem:[#allocation5 + $0x358] sm:$0xff]
    %v168 = vld [vmem:[#allocation5 + $0x360] sm:$0xff]
    %v169 = vld [vmem:[#allocation5 + $0x368] sm:$0xff]
    %v170 = vld [vmem:[#allocation5 + $0x370] sm:$0xff]
    %v171 = vld [vmem:[#allocation5 + $0x378] sm:$0xff]
    %v172 = vld [vmem:[#allocation5 + $0x380] sm:$0xff]
    %v173 = vld [vmem:[#allocation5 + $0x388] sm:$0xff]
    %v174 = vld [vmem:[#allocation5 + $0x390] sm:$0xff]
    %v175 = vld [vmem:[#allocation5 + $0x398] sm:$0xff]
    %v176 = vld [vmem:[#allocation5 + $0x3a0] sm:$0xff]
    %v177 = vld [vmem:[#allocation5 + $0x3a8] sm:$0xff]
    %v178 = vld [vmem:[#allocation5 + $0x3b0] sm:$0xff]
    %v179 = vld [vmem:[#allocation5 + $0x3b8] sm:$0xff]
    %v180 = vld [vmem:[#allocation5 + $0x3c0] sm:$0xff]
    %v181 = vld [vmem:[#allocation5 + $0x3c8] sm:$0xff]
    %v182 = vld [vmem:[#allocation5 + $0x3d0] sm:$0xff]
    %v183 = vld [vmem:[#allocation5 + $0x3d8] sm:$0xff]
    %v184 = vld [vmem:[#allocation5 + $0x3e0] sm:$0xff]
    %v185 = vld [vmem:[#allocation5 + $0x3e8] sm:$0xff]
    %v186 = vld [vmem:[#allocation5 + $0x3f0] sm:$0xff]
    %v187 = vld [vmem:[#allocation5 + $0x3f8] sm:$0xff]
    %v188 = vld [vmem:[#allocation5 + $0x400] sm:$0xff]
    %v189 = vld [vmem:[#allocation5 + $0x408] sm:$0xff]
    %v190 = vld [vmem:[#allocation5 + $0x410] sm:$0xff]
    %v191 = vld [vmem:[#allocation5 + $0x418] sm:$0xff]
    %v192 = vld [vmem:[#allocation5 + $0x420] sm:$0xff]
    %v193 = vld [vmem:[#allocation5 + $0x428] sm:$0xff]
    %v194 = vld [vmem:[#allocation5 + $0x430] sm:$0xff]
    %v195 = vld [vmem:[#allocation5 + $0x438] sm:$0xff]
    %v196 = vld [vmem:[#allocation5 + $0x440] sm:$0xff]
    %v197 = vld [vmem:[#allocation5 + $0x448] sm:$0xff]
    %v198 = vld [vmem:[#allocation5 + $0x450] sm:$0xff]
    %v199 = vld [vmem:[#allocation5 + $0x458] sm:$0xff]
    %v200 = vld [vmem:[#allocation5 + $0x460] sm:$0xff]
    %v201 = vld [vmem:[#allocation5 + $0x468] sm:$0xff]
    %v202 = vld [vmem:[#allocation5 + $0x470] sm:$0xff]
    %v203 = vld [vmem:[#allocation5 + $0x478] sm:$0xff]
    %v204 = vld [vmem:[#allocation5 + $0x480] sm:$0xff]
    %v205 = vld [vmem:[#allocation5 + $0x488] sm:$0xff]
    %v206 = vld [vmem:[#allocation5 + $0x490] sm:$0xff]
    %v207 = vld [vmem:[#allocation5 + $0x498] sm:$0xff]
    %v208 = vld [vmem:[#allocation5 + $0x4a0] sm:$0xff]
    %v209 = vld [vmem:[#allocation5 + $0x4a8] sm:$0xff]
    %v210 = vld [vmem:[#allocation5 + $0x4b0] sm:$0xff]
    %v211 = vld [vmem:[#allocation5 + $0x4b8] sm:$0xff]
    %v212 = vld [vmem:[#allocation5 + $0x4c0] sm:$0xff]
    %v213 = vld [vmem:[#allocation5 + $0x4c8] sm:$0xff]
    %v214 = vld [vmem:[#allocation5 + $0x4d0] sm:$0xff]
    %v215 = vld [vmem:[#allocation5 + $0x4d8] sm:$0xff]
    %v216 = vld [vmem:[#allocation5 + $0x4e0] sm:$0xff]
    %v217 = vld [vmem:[#allocation5 + $0x4e8] sm:$0xff]
    %v218 = vld [vmem:[#allocation5 + $0x4f0] sm:$0xff]
    %v219 = vld [vmem:[#allocation5 + $0x4f8] sm:$0xff]
    %v220 = vld [vmem:[#allocation5 + $0x500] sm:$0xff]
    %v221 = vld [vmem:[#allocation5 + $0x508] sm:$0xff]
    %v222 = vld [vmem:[#allocation5 + $0x510] sm:$0xff]
    %v223 = vld [vmem:[#allocation5 + $0x518] sm:$0xff]
    %v224 = vld [vmem:[#allocation5 + $0x520] sm:$0xff]
    %v225 = vld [vmem:[#allocation5 + $0x528] sm:$0xff]
    %v226 = vld [vmem:[#allocation5 + $0x530] sm:$0xff]
    %v227 = vld [vmem:[#allocation5 + $0x538] sm:$0xff]
    %v228 = vld [vmem:[#allocation5 + $0x540] sm:$0xff]
    %v229 = vld [vmem:[#allocation5 + $0x548] sm:$0xff]
    %v230 = vld [vmem:[#allocation5 + $0x550] sm:$0xff]
    %v231 = vld [vmem:[#allocation5 + $0x558] sm:$0xff]
    %v232 = vld [vmem:[#allocation5 + $0x560] sm:$0xff]
    %v233 = vld [vmem:[#allocation5 + $0x568] sm:$0xff]
    %v234 = vld [vmem:[#allocation5 + $0x570] sm:$0xff]
    %v235 = vld [vmem:[#allocation5 + $0x578] sm:$0xff]
    %v236 = vld [vmem:[#allocation5 + $0x580] sm:$0xff]
    %v237 = vld [vmem:[#allocation5 + $0x588] sm:$0xff]
    %v238 = vld [vmem:[#allocation5 + $0x590] sm:$0xff]
    %v239 = vld [vmem:[#allocation5 + $0x598] sm:$0xff]
    %v240 = vld [vmem:[#allocation5 + $0x5a0] sm:$0xff]
    %v241 = vld [vmem:[#allocation5 + $0x5a8] sm:$0xff]
    %v242 = vld [vmem:[#allocation5 + $0x5b0] sm:$0xff]
    %v243 = vld [vmem:[#allocation5 + $0x5b8] sm:$0xff]
    %v244 = vld [vmem:[#allocation5 + $0x5c0] sm:$0xff]
    %v245 = vld [vmem:[#allocation5 + $0x5c8] sm:$0xff]
    %v246 = vld [vmem:[#allocation5 + $0x5d0] sm:$0xff]
    %v247 = vld [vmem:[#allocation5 + $0x5d8] sm:$0xff]
    %v248 = vld [vmem:[#allocation5 + $0x5e0] sm:$0xff]
    %v249 = vld [vmem:[#allocation5 + $0x5e8] sm:$0xff]
    %v250 = vld [vmem:[#allocation5 + $0x5f0] sm:$0xff]
    %v251 = vld [vmem:[#allocation5 + $0x5f8] sm:$0xff]
    %v252 = vld [vmem:[#allocation5 + $0x600] sm:$0xff]
    %v253 = vld [vmem:[#allocation5 + $0x608] sm:$0xff]
    %v254 = vld [vmem:[#allocation5 + $0x610] sm:$0xff]
    %v255 = vld [vmem:[#allocation5 + $0x618] sm:$0xff]
    %v256 = vld [vmem:[#allocation5 + $0x620] sm:$0xff]
    %v257 = vld [vmem:[#allocation5 + $0x628] sm:$0xff]
    %v258 = vld [vmem:[#allocation5 + $0x630] sm:$0xff]
    %v259 = vld [vmem:[#allocation5 + $0x638] sm:$0xff]
    %v260 = vld [vmem:[#allocation5 + $0x640] sm:$0xff]
    %v261 = vld [vmem:[#allocation5 + $0x648] sm:$0xff]
    %v262 = vld [vmem:[#allocation5 + $0x650] sm:$0xff]
    %v263 = vld [vmem:[#allocation5 + $0x658] sm:$0xff]
    %v264 = vld [vmem:[#allocation5 + $0x660] sm:$0xff]
    %v265 = vld [vmem:[#allocation5 + $0x668] sm:$0xff]
    %v266 = vld [vmem:[#allocation5 + $0x670] sm:$0xff]
    %v267 = vld [vmem:[#allocation5 + $0x678] sm:$0xff]
    %v268 = vld [vmem:[#allocation5 + $0x680] sm:$0xff]
    %v269 = vld [vmem:[#allocation5 + $0x688] sm:$0xff]
    %v270 = vld [vmem:[#allocation5 + $0x690] sm:$0xff]
    %v271 = vld [vmem:[#allocation5 + $0x698] sm:$0xff]
    %v272 = vld [vmem:[#allocation5 + $0x6a0] sm:$0xff]
    %v273 = vld [vmem:[#allocation5 + $0x6a8] sm:$0xff]
    %v274 = vld [vmem:[#allocation5 + $0x6b0] sm:$0xff]
    %v275 = vld [vmem:[#allocation5 + $0x6b8] sm:$0xff]
    %v276 = vld [vmem:[#allocation5 + $0x6c0] sm:$0xff]
    %v277 = vld [vmem:[#allocation5 + $0x6c8] sm:$0xff]
    %v278 = vld [vmem:[#allocation5 + $0x6d0] sm:$0xff]
    %v279 = vld [vmem:[#allocation5 + $0x6d8] sm:$0xff]
    %v280 = vld [vmem:[#allocation5 + $0x6e0] sm:$0xff]
    %v281 = vld [vmem:[#allocation5 + $0x6e8] sm:$0xff]
    %v282 = vld [vmem:[#allocation5 + $0x6f0] sm:$0xff]
    %v283 = vld [vmem:[#allocation5 + $0x6f8] sm:$0xff]
    %v284 = vld [vmem:[#allocation5 + $0x700] sm:$0xff]
    %v285 = vld [vmem:[#allocation5 + $0x708] sm:$0xff]
    %v286 = vld [vmem:[#allocation5 + $0x710] sm:$0xff]
    %v287 = vld [vmem:[#allocation5 + $0x718] sm:$0xff]
    %v288 = vld [vmem:[#allocation5 + $0x720] sm:$0xff]
    %v289 = vld [vmem:[#allocation5 + $0x728] sm:$0xff]
    %v290 = vld [vmem:[#allocation5 + $0x730] sm:$0xff]
    %v291 = vld [vmem:[#allocation5 + $0x738] sm:$0xff]
    %v292 = vld [vmem:[#allocation5 + $0x740] sm:$0xff]
    %v293 = vld [vmem:[#allocation5 + $0x748] sm:$0xff]
    %v294 = vld [vmem:[#allocation5 + $0x750] sm:$0xff]
    %v295 = vld [vmem:[#allocation5 + $0x758] sm:$0xff]
    %v296 = vld [vmem:[#allocation5 + $0x760] sm:$0xff]
    %v297 = vld [vmem:[#allocation5 + $0x768] sm:$0xff]
    %v298 = vld [vmem:[#allocation5 + $0x770] sm:$0xff]
    %v299 = vld [vmem:[#allocation5 + $0x778] sm:$0xff]
    %v300 = vld [vmem:[#allocation5 + $0x780] sm:$0xff]
    %v301 = vld [vmem:[#allocation5 + $0x788] sm:$0xff]
    %v302 = vld [vmem:[#allocation5 + $0x790] sm:$0xff]
    %v303 = vld [vmem:[#allocation5 + $0x798] sm:$0xff]
    %v304 = vld [vmem:[#allocation5 + $0x7a0] sm:$0xff]
    %v305 = vld [vmem:[#allocation5 + $0x7a8] sm:$0xff]
    %v306 = vld [vmem:[#allocation5 + $0x7b0] sm:$0xff]
    %v307 = vld [vmem:[#allocation5 + $0x7b8] sm:$0xff]
    %v308 = vld [vmem:[#allocation5 + $0x7c0] sm:$0xff]
    %v309 = vld [vmem:[#allocation5 + $0x7c8] sm:$0xff]
    %v310 = vld [vmem:[#allocation5 + $0x7d0] sm:$0xff]
    %v311 = vld [vmem:[#allocation5 + $0x7d8] sm:$0xff]
    %v312 = vld [vmem:[#allocation5 + $0x7e0] sm:$0xff]
    %v313 = vld [vmem:[#allocation5 + $0x7e8] sm:$0xff]
    %v314 = vld [vmem:[#allocation5 + $0x7f0] sm:$0xff]
    %v315 = vld [vmem:[#allocation5 + $0x7f8] sm:$0xff]
    %v316 = vld [vmem:[#allocation5 + $0x800] sm:$0xff]
    %v317 = vld [vmem:[#allocation5 + $0x808] sm:$0xff]
    %v318 = vld [vmem:[#allocation5 + $0x810] sm:$0xf]
    %v319 = vld [vmem:[#allocation5 + $0x818] sm:$0xf]
    %v320 = vld [vmem:[#allocation5 + $0x820] sm:$0xf]
    %v321 = vld [vmem:[#allocation5 + $0x828] sm:$0xf]
    %v322 = vld [vmem:[#allocation5 + $0x830] sm:$0xf]
    %v323 = vld [vmem:[#allocation5 + $0x838] sm:$0xf]
    %v324 = vld [vmem:[#allocation7] sm:$0x3f]
    %v326 = vlaneseq
    %v327 = vshrl.u32 %v326, 7
    %v328 = vsub.s32 0, %v327
    %v329 = vrot.slane %v324, %v328
    %v330 = vlaneseq
    %v331 = vshrl.u32 %v330, 7
    %v332 = vsub.s32 1, %v331
    %v333 = vrot.slane %v324, %v332
    %v334 = vlaneseq
    %v335 = vshrl.u32 %v334, 7
    %v336 = vsub.s32 2, %v335
    %v337 = vrot.slane %v324, %v336
    %v338 = vlaneseq
    %v339 = vshrl.u32 %v338, 7
    %v340 = vsub.s32 3, %v339
    %v341 = vrot.slane %v324, %v340
    %v342 = vlaneseq
    %v343 = vshrl.u32 %v342, 7
    %v344 = vsub.s32 4, %v343
    %v345 = vrot.slane %v324, %v344
    %v346 = vlaneseq
    %v347 = vshrl.u32 %v346, 7
    %v348 = vsub.s32 5, %v347
    %v349 = vrot.slane %v324, %v348
    %vm356 = vcmask 752640
    %v358 = vsel %vm356, %v56, 0
    %v361 = vsel %vm356, %v59, 0
    %vm363 = vcmask 1043456
    %v365 = vsel %vm363, %v318, 0
    %v368 = vsel %vm363, %v319, 0
    %v371 = vsel %vm363, %v320, 0
    %v374 = vsel %vm363, %v321, 0
    %v377 = vsel %vm363, %v322, 0
    %v380 = vsel %vm363, %v323, 0
    %382 = vmatprep.subr.mxu0 %v61
    %383 = vmatpush1.msra.mxu0 %v60
    %384 = vmatprep.subr.mxu0 %v67
    %385 = vmatpush1.msra.mxu0 %v66
    %386 = vmatprep.subr.mxu0 %v73
    %387 = vmatpush1.msra.mxu0 %v72
    %388 = vmatprep.subr.mxu0 %v79
    %389 = vmatpush1.msra.mxu0 %v78
    %390 = vmatprep.subr.mxu0 %v85
    %391 = vmatpush1.msra.mxu0 %v84
    %392 = vmatprep.subr.mxu0 %v91
    %393 = vmatpush1.msra.mxu0 %v90
    %394 = vmatprep.subr.mxu0 %v97
    %395 = vmatpush1.msra.mxu0 %v96
    %396 = vmatprep.subr.mxu0 %v103
    %397 = vmatpush1.msra.mxu0 %v102
    %398 = vmatprep.subr.mxu0 %v109
    %399 = vmatpush1.msra.mxu0 %v108
    %400 = vmatprep.subr.mxu0 %v115
    %401 = vmatpush1.msra.mxu0 %v114
    %402 = vmatprep.subr.mxu0 %v121
    %403 = vmatpush1.msra.mxu0 %v120
    %404 = vmatprep.subr.mxu0 %v127
    %405 = vmatpush1.msra.mxu0 %v126
    %406 = vmatprep.subr.mxu0 %v133
    %407 = vmatpush1.msra.mxu0 %v132
    %408 = vmatprep.subr.mxu0 %v139
    %409 = vmatpush1.msra.mxu0 %v138
    %410 = vmatprep.subr.mxu0 %v145
    %411 = vmatpush1.msra.mxu0 %v144
    %412 = vmatprep.subr.mxu0 %v151
    %413 = vmatpush1.msra.mxu0 %v150
    %414 = vmatprep.subr.mxu0 %v157
    %415 = vmatpush1.msra.mxu0 %v156
    %416 = vmatprep.subr.mxu0 %v163
    %417 = vmatpush1.msra.mxu0 %v162
    %418 = vmatprep.subr.mxu0 %v169
    %419 = vmatpush1.msra.mxu0 %v168
    %420 = vmatprep.subr.mxu0 %v175
    %421 = vmatpush1.msra.mxu0 %v174
    %422 = vmatprep.subr.mxu0 %v181
    %423 = vmatpush1.msra.mxu0 %v180
    %424 = vmatprep.subr.mxu0 %v187
    %425 = vmatpush1.msra.mxu0 %v186
    %426 = vmatprep.subr.mxu0 %v193
    %427 = vmatpush1.msra.mxu0 %v192
    %428 = vmatprep.subr.mxu0 %v199
    %429 = vmatpush1.msra.mxu0 %v198
    %430 = vmatprep.subr.mxu0 %v205
    %431 = vmatpush1.msra.mxu0 %v204
    %432 = vmatprep.subr.mxu0 %v211
    %433 = vmatpush1.msra.mxu0 %v210
    %434 = vmatprep.subr.mxu0 %v217
    %435 = vmatpush1.msra.mxu0 %v216
    %436 = vmatprep.subr.mxu0 %v223
    %437 = vmatpush1.msra.mxu0 %v222
    %438 = vmatprep.subr.mxu0 %v229
    %439 = vmatpush1.msra.mxu0 %v228
    %440 = vmatprep.subr.mxu0 %v235
    %441 = vmatpush1.msra.mxu0 %v234
    %442 = vmatprep.subr.mxu0 %v241
    %443 = vmatpush1.msra.mxu0 %v240
    %444 = vmatprep.subr.mxu0 %v247
    %445 = vmatpush1.msra.mxu0 %v246
    %446 = vmatprep.mubr.f32.mxu0 %v55
    %447 = vmatmul.mubr.f32.gmra.mrb[0].mxu0 %v54
    %v448 = vpop.f32.mrb[0].mxu0
    %v449 = vadd.f32 %v329, %v448
    %v450 = vpop.f32.mrb[0].mxu0
    %v451 = vadd.f32 %v333, %v450
    %452 = vmatprep.mubr.f32.mxu0 %v58
    %453 = vmatmul.mubr.f32.gmra.mrb[0].mxu0 %v57
    %v454 = vpop.f32.mrb[0].mxu0
    %v455 = vadd.f32 %v329, %v454
    %v456 = vpop.f32.mrb[0].mxu0
    %v457 = vadd.f32 %v333, %v456
    %458 = vdwg.mxu0
    %459 = vmatprep.subr.mxu0 %v253
    %460 = vmatpush1.msra.mxu0 %v252
    %461 = vmatprep.subr.mxu0 %v259
    %462 = vmatpush1.msra.mxu0 %v258
    %463 = vmatprep.subr.mxu0 %v265
    %464 = vmatpush1.msra.mxu0 %v264
    %465 = vmatprep.subr.mxu0 %v271
    %466 = vmatpush1.msra.mxu0 %v270
    %467 = vmatprep.subr.mxu0 %v277
    %468 = vmatpush1.msra.mxu0 %v276
    %469 = vmatprep.subr.mxu0 %v283
    %470 = vmatpush1.msra.mxu0 %v282
    %471 = vmatprep.subr.mxu0 %v289
    %472 = vmatpush1.msra.mxu0 %v288
    %473 = vmatprep.subr.mxu0 %v295
    %474 = vmatpush1.msra.mxu0 %v294
    %475 = vmatprep.subr.mxu0 %v301
    %476 = vmatpush1.msra.mxu0 %v300
    %477 = vmatprep.subr.mxu0 %v307
    %478 = vmatpush1.msra.mxu0 %v306
    %479 = vmatprep.subr.mxu0 %v313
    %480 = vmatpush1.msra.mxu0 %v312
    %481 = vmatprep.subr.mxu0 %v368
    %482 = vmatpush1.msra.mxu0 %v365
    %483 = vmatprep.subr.mxu0 0.0
    %484 = vmatpush1.msra.mxu0 0.0
    %485 = vmatprep.subr.mxu0 0.0
    %486 = vmatpush1.msra.mxu0 0.0
    %487 = vmatprep.subr.mxu0 0.0
    %488 = vmatpush1.msra.mxu0 0.0
    %489 = vmatprep.subr.mxu0 0.0
    %490 = vmatpush1.msra.mxu0 0.0
    %491 = vmatprep.subr.mxu0 0.0
    %492 = vmatpush1.msra.mxu0 0.0
    %493 = vmatprep.subr.mxu0 0.0
    %494 = vmatpush1.msra.mxu0 0.0
    %495 = vmatprep.subr.mxu0 0.0
    %496 = vmatpush1.msra.mxu0 0.0
    %497 = vmatprep.subr.mxu0 0.0
    %498 = vmatpush1.msra.mxu0 0.0
    %499 = vmatprep.subr.mxu0 0.0
    %500 = vmatpush1.msra.mxu0 0.0
    %501 = vmatprep.subr.mxu0 0.0
    %502 = vmatpush1.msra.mxu0 0.0
    %503 = vmatprep.subr.mxu0 0.0
    %504 = vmatpush1.msra.mxu0 0.0
    %505 = vmatprep.subr.mxu0 0.0
    %506 = vmatpush1.msra.mxu0 0.0
    %507 = vmatprep.subr.mxu0 0.0
    %508 = vmatpush1.msra.mxu0 0.0
    %509 = vmatprep.subr.mxu0 0.0
    %510 = vmatpush1.msra.mxu0 0.0
    %511 = vmatprep.subr.mxu0 0.0
    %512 = vmatpush1.msra.mxu0 0.0
    %513 = vmatprep.subr.mxu0 0.0
    %514 = vmatpush1.msra.mxu0 0.0
    %515 = vmatprep.subr.mxu0 0.0
    %516 = vmatpush1.msra.mxu0 0.0
    %517 = vmatprep.subr.mxu0 0.0
    %518 = vmatpush1.msra.mxu0 0.0
    %519 = vmatprep.subr.mxu0 0.0
    %520 = vmatpush1.msra.mxu0 0.0
    %521 = vmatprep.subr.mxu0 0.0
    %522 = vmatpush1.msra.mxu0 0.0
    %523 = vmatprep.mubr.f32.mxu0 0.0
    %524 = vmatmul.mubr.f32.gmra.mrb[0].mxu0 %v358
    %v525 = vpop.f32.mrb[0].mxu0
    %v526 = vadd.f32 %v449, %v525
    %v527 = vpop.f32.mrb[0].mxu0
    %v528 = vadd.f32 %v451, %v527
    %529 = vmatprep.mubr.f32.mxu0 0.0
    %530 = vmatmul.mubr.f32.gmra.mrb[0].mxu0 %v361
    %v531 = vpop.f32.mrb[0].mxu0
    %v532 = vadd.f32 %v455, %v531
    %v533 = vpop.f32.mrb[0].mxu0
    %v534 = vadd.f32 %v457, %v533
    %535 = vdwg.mxu0
    %536 = vmatprep.subr.mxu0 %v63
    %537 = vmatpush1.msra.mxu0 %v62
    %538 = vmatprep.subr.mxu0 %v69
    %539 = vmatpush1.msra.mxu0 %v68
    %540 = vmatprep.subr.mxu0 %v75
    %541 = vmatpush1.msra.mxu0 %v74
    %542 = vmatprep.subr.mxu0 %v81
    %543 = vmatpush1.msra.mxu0 %v80
    %544 = vmatprep.subr.mxu0 %v87
    %545 = vmatpush1.msra.mxu0 %v86
    %546 = vmatprep.subr.mxu0 %v93
    %547 = vmatpush1.msra.mxu0 %v92
    %548 = vmatprep.subr.mxu0 %v99
    %549 = vmatpush1.msra.mxu0 %v98
    %550 = vmatprep.subr.mxu0 %v105
    %551 = vmatpush1.msra.mxu0 %v104
    %552 = vmatprep.subr.mxu0 %v111
    %553 = vmatpush1.msra.mxu0 %v110
    %554 = vmatprep.subr.mxu0 %v117
    %555 = vmatpush1.msra.mxu0 %v116
    %556 = vmatprep.subr.mxu0 %v123
    %557 = vmatpush1.msra.mxu0 %v122
    %558 = vmatprep.subr.mxu0 %v129
    %559 = vmatpush1.msra.mxu0 %v128
    %560 = vmatprep.subr.mxu0 %v135
    %561 = vmatpush1.msra.mxu0 %v134
    %562 = vmatprep.subr.mxu0 %v141
    %563 = vmatpush1.msra.mxu0 %v140
    %564 = vmatprep.subr.mxu0 %v147
    %565 = vmatpush1.msra.mxu0 %v146
    %566 = vmatprep.subr.mxu0 %v153
    %567 = vmatpush1.msra.mxu0 %v152
    %568 = vmatprep.subr.mxu0 %v159
    %569 = vmatpush1.msra.mxu0 %v158
    %570 = vmatprep.subr.mxu0 %v165
    %571 = vmatpush1.msra.mxu0 %v164
    %572 = vmatprep.subr.mxu0 %v171
    %573 = vmatpush1.msra.mxu0 %v170
    %574 = vmatprep.subr.mxu0 %v177
    %575 = vmatpush1.msra.mxu0 %v176
    %576 = vmatprep.subr.mxu0 %v183
    %577 = vmatpush1.msra.mxu0 %v182
    %578 = vmatprep.subr.mxu0 %v189
    %579 = vmatpush1.msra.mxu0 %v188
    %580 = vmatprep.subr.mxu0 %v195
    %581 = vmatpush1.msra.mxu0 %v194
    %582 = vmatprep.subr.mxu0 %v201
    %583 = vmatpush1.msra.mxu0 %v200
    %584 = vmatprep.subr.mxu0 %v207
    %585 = vmatpush1.msra.mxu0 %v206
    %586 = vmatprep.subr.mxu0 %v213
    %587 = vmatpush1.msra.mxu0 %v212
    %588 = vmatprep.subr.mxu0 %v219
    %589 = vmatpush1.msra.mxu0 %v218
    %590 = vmatprep.subr.mxu0 %v225
    %591 = vmatpush1.msra.mxu0 %v224
    %592 = vmatprep.subr.mxu0 %v231
    %593 = vmatpush1.msra.mxu0 %v230
    %594 = vmatprep.subr.mxu0 %v237
    %595 = vmatpush1.msra.mxu0 %v236
    %596 = vmatprep.subr.mxu0 %v243
    %597 = vmatpush1.msra.mxu0 %v242
    %598 = vmatprep.subr.mxu0 %v249
    %599 = vmatpush1.msra.mxu0 %v248
    %600 = vmatprep.mubr.f32.mxu0 %v55
    %601 = vmatmul.mubr.f32.gmra.mrb[0].mxu0 %v54
    %v602 = vpop.f32.mrb[0].mxu0
    %v603 = vadd.f32 %v337, %v602
    %v604 = vpop.f32.mrb[0].mxu0
    %v605 = vadd.f32 %v341, %v604
    %606 = vmatprep.mubr.f32.mxu0 %v58
    %607 = vmatmul.mubr.f32.gmra.mrb[0].mxu0 %v57
    %v608 = vpop.f32.mrb[0].mxu0
    %v609 = vadd.f32 %v337, %v608
    %v610 = vpop.f32.mrb[0].mxu0
    %v611 = vadd.f32 %v341, %v610
    %612 = vdwg.mxu0
    %613 = vmatprep.subr.mxu0 %v255
    %614 = vmatpush1.msra.mxu0 %v254
    %615 = vmatprep.subr.mxu0 %v261
    %616 = vmatpush1.msra.mxu0 %v260
    %617 = vmatprep.subr.mxu0 %v267
    %618 = vmatpush1.msra.mxu0 %v266
    %619 = vmatprep.subr.mxu0 %v273
    %620 = vmatpush1.msra.mxu0 %v272
    %621 = vmatprep.subr.mxu0 %v279
    %622 = vmatpush1.msra.mxu0 %v278
    %623 = vmatprep.subr.mxu0 %v285
    %624 = vmatpush1.msra.mxu0 %v284
    %625 = vmatprep.subr.mxu0 %v291
    %626 = vmatpush1.msra.mxu0 %v290
    %627 = vmatprep.subr.mxu0 %v297
    %628 = vmatpush1.msra.mxu0 %v296
    %629 = vmatprep.subr.mxu0 %v303
    %630 = vmatpush1.msra.mxu0 %v302
    %631 = vmatprep.subr.mxu0 %v309
    %632 = vmatpush1.msra.mxu0 %v308
    %633 = vmatprep.subr.mxu0 %v315
    %634 = vmatpush1.msra.mxu0 %v314
    %635 = vmatprep.subr.mxu0 %v374
    %636 = vmatpush1.msra.mxu0 %v371
    %637 = vmatprep.subr.mxu0 0.0
    %638 = vmatpush1.msra.mxu0 0.0
    %639 = vmatprep.subr.mxu0 0.0
    %640 = vmatpush1.msra.mxu0 0.0
    %641 = vmatprep.subr.mxu0 0.0
    %642 = vmatpush1.msra.mxu0 0.0
    %643 = vmatprep.subr.mxu0 0.0
    %644 = vmatpush1.msra.mxu0 0.0
    %645 = vmatprep.subr.mxu0 0.0
    %646 = vmatpush1.msra.mxu0 0.0
    %647 = vmatprep.subr.mxu0 0.0
    %648 = vmatpush1.msra.mxu0 0.0
    %649 = vmatprep.subr.mxu0 0.0
    %650 = vmatpush1.msra.mxu0 0.0
    %651 = vmatprep.subr.mxu0 0.0
    %652 = vmatpush1.msra.mxu0 0.0
    %653 = vmatprep.subr.mxu0 0.0
    %654 = vmatpush1.msra.mxu0 0.0
    %655 = vmatprep.subr.mxu0 0.0
    %656 = vmatpush1.msra.mxu0 0.0
    %657 = vmatprep.subr.mxu0 0.0
    %658 = vmatpush1.msra.mxu0 0.0
    %659 = vmatprep.subr.mxu0 0.0
    %660 = vmatpush1.msra.mxu0 0.0
    %661 = vmatprep.subr.mxu0 0.0
    %662 = vmatpush1.msra.mxu0 0.0
    %663 = vmatprep.subr.mxu0 0.0
    %664 = vmatpush1.msra.mxu0 0.0
    %665 = vmatprep.subr.mxu0 0.0
    %666 = vmatpush1.msra.mxu0 0.0
    %667 = vmatprep.subr.mxu0 0.0
    %668 = vmatpush1.msra.mxu0 0.0
    %669 = vmatprep.subr.mxu0 0.0
    %670 = vmatpush1.msra.mxu0 0.0
    %671 = vmatprep.subr.mxu0 0.0
    %672 = vmatpush1.msra.mxu0 0.0
    %673 = vmatprep.subr.mxu0 0.0
    %674 = vmatpush1.msra.mxu0 0.0
    %675 = vmatprep.subr.mxu0 0.0
    %676 = vmatpush1.msra.mxu0 0.0
    %677 = vmatprep.mubr.f32.mxu0 0.0
    %678 = vmatmul.mubr.f32.gmra.mrb[0].mxu0 %v358
    %v679 = vpop.f32.mrb[0].mxu0
    %v680 = vadd.f32 %v603, %v679
    %v681 = vpop.f32.mrb[0].mxu0
    %v682 = vadd.f32 %v605, %v681
    %683 = vmatprep.mubr.f32.mxu0 0.0
    %684 = vmatmul.mubr.f32.gmra.mrb[0].mxu0 %v361
    %v685 = vpop.f32.mrb[0].mxu0
    %v686 = vadd.f32 %v609, %v685
    %v687 = vpop.f32.mrb[0].mxu0
    %v688 = vadd.f32 %v611, %v687
    %689 = vdwg.mxu0
    %690 = vmatprep.subr.mxu0 %v65
    %691 = vmatpush1.msra.mxu0 %v64
    %692 = vmatprep.subr.mxu0 %v71
    %693 = vmatpush1.msra.mxu0 %v70
    %694 = vmatprep.subr.mxu0 %v77
    %695 = vmatpush1.msra.mxu0 %v76
    %696 = vmatprep.subr.mxu0 %v83
    %697 = vmatpush1.msra.mxu0 %v82
    %698 = vmatprep.subr.mxu0 %v89
    %699 = vmatpush1.msra.mxu0 %v88
    %700 = vmatprep.subr.mxu0 %v95
    %701 = vmatpush1.msra.mxu0 %v94
    %702 = vmatprep.subr.mxu0 %v101
    %703 = vmatpush1.msra.mxu0 %v100
    %704 = vmatprep.subr.mxu0 %v107
    %705 = vmatpush1.msra.mxu0 %v106
    %706 = vmatprep.subr.mxu0 %v113
    %707 = vmatpush1.msra.mxu0 %v112
    %708 = vmatprep.subr.mxu0 %v119
    %709 = vmatpush1.msra.mxu0 %v118
    %710 = vmatprep.subr.mxu0 %v125
    %711 = vmatpush1.msra.mxu0 %v124
    %712 = vmatprep.subr.mxu0 %v131
    %713 = vmatpush1.msra.mxu0 %v130
    %714 = vmatprep.subr.mxu0 %v137
    %715 = vmatpush1.msra.mxu0 %v136
    %716 = vmatprep.subr.mxu0 %v143
    %717 = vmatpush1.msra.mxu0 %v142
    %718 = vmatprep.subr.mxu0 %v149
    %719 = vmatpush1.msra.mxu0 %v148
    %720 = vmatprep.subr.mxu0 %v155
    %721 = vmatpush1.msra.mxu0 %v154
    %722 = vmatprep.subr.mxu0 %v161
    %723 = vmatpush1.msra.mxu0 %v160
    %724 = vmatprep.subr.mxu0 %v167
    %725 = vmatpush1.msra.mxu0 %v166
    %726 = vmatprep.subr.mxu0 %v173
    %727 = vmatpush1.msra.mxu0 %v172
    %728 = vmatprep.subr.mxu0 %v179
    %729 = vmatpush1.msra.mxu0 %v178
    %730 = vmatprep.subr.mxu0 %v185
    %731 = vmatpush1.msra.mxu0 %v184
    %732 = vmatprep.subr.mxu0 %v191
    %733 = vmatpush1.msra.mxu0 %v190
    %734 = vmatprep.subr.mxu0 %v197
    %735 = vmatpush1.msra.mxu0 %v196
    %736 = vmatprep.subr.mxu0 %v203
    %737 = vmatpush1.msra.mxu0 %v202
    %738 = vmatprep.subr.mxu0 %v209
    %739 = vmatpush1.msra.mxu0 %v208
    %740 = vmatprep.subr.mxu0 %v215
    %741 = vmatpush1.msra.mxu0 %v214
    %742 = vmatprep.subr.mxu0 %v221
    %743 = vmatpush1.msra.mxu0 %v220
    %744 = vmatprep.subr.mxu0 %v227
    %745 = vmatpush1.msra.mxu0 %v226
    %746 = vmatprep.subr.mxu0 %v233
    %747 = vmatpush1.msra.mxu0 %v232
    %748 = vmatprep.subr.mxu0 %v239
    %749 = vmatpush1.msra.mxu0 %v238
    %750 = vmatprep.subr.mxu0 %v245
    %751 = vmatpush1.msra.mxu0 %v244
    %752 = vmatprep.subr.mxu0 %v251
    %753 = vmatpush1.msra.mxu0 %v250
    %754 = vmatprep.mubr.f32.mxu0 %v55
    %755 = vmatmul.mubr.f32.gmra.mrb[0].mxu0 %v54
    %v756 = vpop.f32.mrb[0].mxu0
    %v757 = vadd.f32 %v345, %v756
    %v758 = vpop.f32.mrb[0].mxu0
    %v759 = vadd.f32 %v349, %v758
    %760 = vmatprep.mubr.f32.mxu0 %v58
    %761 = vmatmul.mubr.f32.gmra.mrb[0].mxu0 %v57
    %v762 = vpop.f32.mrb[0].mxu0
    %v763 = vadd.f32 %v345, %v762
    %v764 = vpop.f32.mrb[0].mxu0
    %v765 = vadd.f32 %v349, %v764
    %766 = vdwg.mxu0
    %767 = vmatprep.subr.mxu0 %v257
    %768 = vmatpush1.msra.mxu0 %v256
    %769 = vmatprep.subr.mxu0 %v263
    %770 = vmatpush1.msra.mxu0 %v262
    %771 = vmatprep.subr.mxu0 %v269
    %772 = vmatpush1.msra.mxu0 %v268
    %773 = vmatprep.subr.mxu0 %v275
    %774 = vmatpush1.msra.mxu0 %v274
    %775 = vmatprep.subr.mxu0 %v281
    %776 = vmatpush1.msra.mxu0 %v280
    %777 = vmatprep.subr.mxu0 %v287
    %778 = vmatpush1.msra.mxu0 %v286
    %779 = vmatprep.subr.mxu0 %v293
    %780 = vmatpush1.msra.mxu0 %v292
    %781 = vmatprep.subr.mxu0 %v299
    %782 = vmatpush1.msra.mxu0 %v298
    %783 = vmatprep.subr.mxu0 %v305
    %784 = vmatpush1.msra.mxu0 %v304
    %785 = vmatprep.subr.mxu0 %v311
    %786 = vmatpush1.msra.mxu0 %v310
    %787 = vmatprep.subr.mxu0 %v317
    %788 = vmatpush1.msra.mxu0 %v316
    %789 = vmatprep.subr.mxu0 %v380
    %790 = vmatpush1.msra.mxu0 %v377
    %791 = vmatprep.subr.mxu0 0.0
    %792 = vmatpush1.msra.mxu0 0.0
    %793 = vmatprep.subr.mxu0 0.0
    %794 = vmatpush1.msra.mxu0 0.0
    %795 = vmatprep.subr.mxu0 0.0
    %796 = vmatpush1.msra.mxu0 0.0
    %797 = vmatprep.subr.mxu0 0.0
    %798 = vmatpush1.msra.mxu0 0.0
    %799 = vmatprep.subr.mxu0 0.0
    %800 = vmatpush1.msra.mxu0 0.0
    %801 = vmatprep.subr.mxu0 0.0
    %802 = vmatpush1.msra.mxu0 0.0
    %803 = vmatprep.subr.mxu0 0.0
    %804 = vmatpush1.msra.mxu0 0.0
    %805 = vmatprep.subr.mxu0 0.0
    %806 = vmatpush1.msra.mxu0 0.0
    %807 = vmatprep.subr.mxu0 0.0
    %808 = vmatpush1.msra.mxu0 0.0
    %809 = vmatprep.subr.mxu0 0.0
    %810 = vmatpush1.msra.mxu0 0.0
    %811 = vmatprep.subr.mxu0 0.0
    %812 = vmatpush1.msra.mxu0 0.0
    %813 = vmatprep.subr.mxu0 0.0
    %814 = vmatpush1.msra.mxu0 0.0
    %815 = vmatprep.subr.mxu0 0.0
    %816 = vmatpush1.msra.mxu0 0.0
    %817 = vmatprep.subr.mxu0 0.0
    %818 = vmatpush1.msra.mxu0 0.0
    %819 = vmatprep.subr.mxu0 0.0
    %820 = vmatpush1.msra.mxu0 0.0
    %821 = vmatprep.subr.mxu0 0.0
    %822 = vmatpush1.msra.mxu0 0.0
    %823 = vmatprep.subr.mxu0 0.0
    %824 = vmatpush1.msra.mxu0 0.0
    %825 = vmatprep.subr.mxu0 0.0
    %826 = vmatpush1.msra.mxu0 0.0
    %827 = vmatprep.subr.mxu0 0.0
    %828 = vmatpush1.msra.mxu0 0.0
    %829 = vmatprep.subr.mxu0 0.0
    %830 = vmatpush1.msra.mxu0 0.0
    %831 = vmatprep.mubr.f32.mxu0 0.0
    %832 = vmatmul.mubr.f32.gmra.mrb[0].mxu0 %v358
    %v833 = vpop.f32.mrb[0].mxu0
    %v834 = vadd.f32 %v757, %v833
    %v835 = vpop.f32.mrb[0].mxu0
    %v836 = vadd.f32 %v759, %v835
    %837 = vmatprep.mubr.f32.mxu0 0.0
    %838 = vmatmul.mubr.f32.gmra.mrb[0].mxu0 %v361
    %v839 = vpop.f32.mrb[0].mxu0
    %v840 = vadd.f32 %v763, %v839
    %v841 = vpop.f32.mrb[0].mxu0
    %v842 = vadd.f32 %v765, %v841
    %843 = vdwg.mxu0
    %844 = vst [vmem:[#allocation8] sm:$0xff] %v526
    %845 = vst [vmem:[#allocation8 + $0x8] sm:$0xff] %v528
    %846 = vst [vmem:[#allocation8 + $0x10] sm:$0xff] %v680
    %847 = vst [vmem:[#allocation8 + $0x18] sm:$0xff] %v682
    %848 = vst [vmem:[#allocation8 + $0x20] sm:$0xff] %v834
    %849 = vst [vmem:[#allocation8 + $0x28] sm:$0xff] %v836
    %850 = vst [vmem:[#allocation8 + $0x30] sm:$0xff] %v532
    %851 = vst [vmem:[#allocation8 + $0x38] sm:$0xff] %v534
    %852 = vst [vmem:[#allocation8 + $0x40] sm:$0xff] %v686
    %853 = vst [vmem:[#allocation8 + $0x48] sm:$0xff] %v688
    %854 = vst [vmem:[#allocation8 + $0x50] sm:$0xff] %v840
    %855 = vst [vmem:[#allocation8 + $0x58] sm:$0xff] %v842
    // Predicated region
    $region26: #{tpu_custom_call.1} parent=1 // pred_check
      _
    $region27: #{tpu_custom_call.1} parent=1 // pred_check_branch
      %857 = sbr.rel (0) target = $region29
    $region28: #{tpu_custom_call.1} parent=1 // pred_region
      %s859 = ssub.s32 1536, 1536
      %860 = vsyncadd [#allocation4], %s859
      %s861 = sshll.u32 [#allocation8], 4
      %s862 = int_to_ptr.vmem [resolvable:$true] %s861
      %867 = dma.vmem_to_hbm [thread:$0]  %s862, 1536, %s3, [#allocation4], 768, 768, 48
    $region29: #{tpu_custom_call.1} parent=1 // pred_fallthru
      _
    // Predicated region
    $region30: #{tpu_custom_call.1} parent=1 // pred_check
      _
    $region31: #{tpu_custom_call.1} parent=1 // pred_check_branch
      %869 = sbr.rel (0) target = $region33
    $region32: #{tpu_custom_call.1} parent=1 // pred_region
      %870 = dma.done [#allocation4], 1536
    $region33: #{tpu_custom_call.1} parent=1 // pred_fallthru
      _
    %871 = vsyncpa [#allocation3], 1
    %872 = vsyncpa [#allocation6], 1
    %873 = vsyncpa [#allocation4], 1

</llo_original>
